<compile_context>
chip_gen: v5e
topology: v5e:2x2
jax: 0.10.0
libtpu: 0.0.40
codegen_flags: <defaults>
</compile_context>

<pallas_src>
import jax
import jax.numpy as jnp
from jax.experimental import pallas as pl
from jax.experimental.pallas import tpu as pltpu


def _ntimes_tanh_kernel(n_ref, x_ref, o_ref):
    # n_ref: (1,) f32 scalar-prefetch ref in SMEM; x_ref/o_ref: (tr, C) VMEM tiles.
    xv = x_ref[...].astype(jnp.float32)
    o_ref[...] = (jnp.tanh(xv) * n_ref[0]).astype(o_ref.dtype)


# Prefer 1024 lanes (one contiguous ~4 KiB f32 row); all are multiples of 128.
_LANE_CANDIDATES = (1024, 2048, 4096, 512, 256, 128)


def _pick_lanes(total):
    for lane in _LANE_CANDIDATES:          # prefer layouts with >= 8 rows
        if total % lane == 0 and total // lane >= 8:
            return lane
    for lane in _LANE_CANDIDATES:          # any exact divisor
        if total % lane == 0:
            return lane
    return None                            # T % 128 != 0 -> ragged path


def _default_block_bytes():
    """~4 MiB blocks on v6e/v7x (32 MiB default scoped VMEM), ~2 MiB otherwise."""
    try:
        kind = jax.devices()[0].device_kind.lower()
    except Exception:
        kind = ""
    if ("v6" in kind) or ("v7" in kind):
        return 4 * 1024 * 1024
    return 2 * 1024 * 1024


def ntimes_tanh(x, n, *, block_bytes=None, fast_path_elems=256 * 1024):
    """tanh(x) * n elementwise via a Pallas TPU kernel.

    x: any-shaped array (the PyTorch module uses NCHW); n: scalar.
    fast_path_elems: tensors at or below this size take a fused XLA path
    (launch overhead dwarfs HBM traffic for small feature maps).
    """
    orig_shape = x.shape
    orig_dtype = x.dtype
    T = x.size

    if T == 0:
        return x
    if T <= fast_path_elems:
        return (jnp.tanh(x.astype(jnp.float32)) * jnp.float32(n)).astype(orig_dtype)

    lanes = _pick_lanes(T)

    if lanes is None:
        # T is not a multiple of 128 (rare for NCHW activations): run the
        # kernel on the largest 128-divisible prefix, tiny tail in plain jnp.
        flat = x.reshape(-1)
        head_elems = (T // 128) * 128
        tail = (jnp.tanh(flat[head_elems:].astype(jnp.float32))
                * jnp.float32(n)).astype(orig_dtype)
        if head_elems == 0:
            return tail.reshape(orig_shape)
        head = ntimes_tanh(flat[:head_elems], n,
                           block_bytes=block_bytes,
                           fast_path_elems=fast_path_elems)
        return jnp.concatenate([head, tail]).reshape(orig_shape)

    # --- lane-dense 2D view; every block spans the full column extent ---
    C = lanes
    R = T // lanes
    flat2d = x.reshape(R, C)                       # free reshape, no pad

    itemsize = jnp.dtype(orig_dtype).itemsize
    target = block_bytes if block_bytes is not None else _default_block_bytes()

    tr = max(8, (target // (C * itemsize)) // 8 * 8)   # multiple of 8
    if R >= 16:
        # Keep at least 2 row-blocks so both v7x TensorCores get work.
        tr = min(tr, 8 * max(1, (R // 8) // 2))
    if tr >= R:
        tr = R                                     # single full-extent block
    # else: tr is a multiple of 8 (< R); ragged last block handled by Pallas.

    grid = (pl.cdiv(R, tr),)
    n_arr = jnp.asarray([n], dtype=jnp.float32)

    out = pl.pallas_call(
        _ntimes_tanh_kernel,
        out_shape=jax.ShapeDtypeStruct((R, C), orig_dtype),
        grid_spec=pltpu.PrefetchScalarGridSpec(
            num_scalar_prefetch=1,                 # n -> SMEM, not pipelined
            grid=grid,
            in_specs=[pl.BlockSpec((tr, C), lambda i, n_ref: (i, 0))],
            out_specs=pl.BlockSpec((tr, C), lambda i, n_ref: (i, 0)),
        ),
        compiler_params=pltpu.CompilerParams(
            dimension_semantics=("parallel",)
        ),
    )(n_arr, flat2d)

    return out.reshape(orig_shape)


if __name__ == "__main__":
    key = jax.random.PRNGKey(0)
    n = 3.0  # the "N" in NTimesTanh; deterministic choice

    # Small NCHW input consistent with the GAN face module usage.
    x_small = jax.random.normal(key, (2, 4, 16, 16), dtype=jnp.float32)
    # Moderately sized activation to exercise the multi-block 1-D grid.
    x_big = jax.random.normal(jax.random.PRNGKey(1), (2, 8, 64, 64),
                              dtype=jnp.float32)
    # Ragged element count to exercise the prefix+tail path.
    x_ragged = jax.random.normal(jax.random.PRNGKey(2), (1000,),
                                 dtype=jnp.float32)

    ok = True
    for x in (x_small, x_big, x_ragged):
        y = ntimes_tanh(x, n, fast_path_elems=0)   # force the Pallas kernel
        y = jax.block_until_ready(y)
        ref = jnp.tanh(x) * n
        ok &= (y.shape == x.shape) and (y.dtype == x.dtype)
        ok &= bool(jnp.allclose(y, ref, atol=1e-5, rtol=1e-5))

    assert ok
    print("KERNEL_OK")
</pallas_src>

<mosaic_0001>
module attributes {stable_mosaic.version = 11 : i64} {
  func.func @_ntimes_tanh_kernel(%arg0: i32, %arg1: memref<1xf32, #tpu.memory_space<smem>>, %arg2: memref<8x256xf32, #tpu.memory_space<vmem>>, %arg3: memref<8x256xf32, #tpu.memory_space<vmem>>) attributes {dimension_semantics = [#tpu.dimension_semantics<parallel>], iteration_bounds = array<i64: 1>, scalar_prefetch = 1 : i64, scratch_operands = 0 : i64, tpu.core_type = #tpu.core_type<tc>, window_params = [{transform_indices = @transform_0, window_bounds = array<i64: 8, 256>}, {transform_indices = @transform_1, window_bounds = array<i64: 8, 256>}]} {
    %c0 = arith.constant 0 : index
    %c0_0 = arith.constant 0 : index
    %0 = vector.load %arg2[%c0, %c0_0] : memref<8x256xf32, #tpu.memory_space<vmem>>, vector<8x256xf32>
    %1 = math.tanh %0 : vector<8x256xf32>
    %c0_1 = arith.constant 0 : index
    %2 = memref.load %arg1[%c0_1] : memref<1xf32, #tpu.memory_space<smem>>
    %3 = vector.broadcast %2 : f32 to vector<8x256xf32>
    %4 = arith.mulf %1, %3 : vector<8x256xf32>
    %c0_2 = arith.constant 0 : index
    %c0_3 = arith.constant 0 : index
    %5 = vector.load %arg3[%c0_2, %c0_3] : memref<8x256xf32, #tpu.memory_space<vmem>>, vector<8x256xf32>
    tpu.vector_store %arg3[%c0_2, %c0_3], %4 {strides = array<i32>} : memref<8x256xf32, #tpu.memory_space<vmem>>, vector<8x256xf32>,
    return
  }
  func.func @transform_0(%arg0: i32, %arg1: memref<1xf32, #tpu.memory_space<smem>>) -> (i32, i32) {
    %c0_i32 = arith.constant 0 : i32
    %c0_i32_0 = arith.constant 0 : i32
    return %arg0, %c0_i32 : i32, i32
  }
  func.func @transform_1(%arg0: i32, %arg1: memref<1xf32, #tpu.memory_space<smem>>) -> (i32, i32) {
    %c0_i32 = arith.constant 0 : i32
    %c0_i32_0 = arith.constant 0 : i32
    return %arg0, %c0_i32 : i32, i32
  }
}

</mosaic_0001>

<llo_original>
// kernel: tpu_custom_call.1
$region0: #{tpu_custom_call.1}
  #allocation0 [shape = 'u32[]', space=smem, size = 0x4, offset = 0x4, fixed_abs, tag = 'smem constant byte address 0x4 - core index']
  #allocation1 [shape = 'u32[72,128]{1,0:T(1,128)}', space=vmem, size = 0x9000, scoped, tag = 'internal scratch']
  #allocation2 [shape = 's32[1]{0}', space=sflag, size = 0x4, scoped, tag = 'scoped memory for tpu_custom_call.1']
  #allocation3 [shape = 'f32[1]{0:T(128)S(6)}', space=smem, size = 0x200, scoped, tag = 'prefetched SMEM operand 0']
  %s0 = inlined_call_operand.<no memory space> [shape: f32[1], index: 0, kind: input, shape index: {}]
  %s1 = inlined_call_operand.hbm [shape: f32[8,256], index: 1, kind: input, shape index: {}]
  %s2 = inlined_call_operand.hbm [shape: f32[8,256], index: 2, kind: output, shape index: {}]
  %s3 = sld [smem:[#allocation0]]
  $region18: #{tpu_custom_call.1} parent=0
    _
  %s5 = ssub.s32 1, %s3
  %s6 = scalar_select 0, %s5, %s3
  %7 = sst [smem:[#allocation3]] %s0
  $region1: #{tpu_custom_call.1} parent=0
    #allocation4 [shape = 'u8[8192]{0}', space=vmem, size = 0x2000, scoped, tag = 'input window, operand 1, single buffered']
    #allocation5 [shape = 's32[1]{0}', space=sflag, size = 0x4, scoped, tag = 'scoped memory for tpu_custom_call.1']
    #allocation6 [shape = 's32[1]{0}', space=sflag, size = 0x4, scoped, tag = 'scoped memory for tpu_custom_call.1']
    #allocation7 [shape = 'u8[8192]{0}', space=vmem, size = 0x2000, scoped, tag = 'output window, operand 0, single buffered']
    %8 = vsyncpa [#allocation5], 0
    %9 = vsyncpa [#allocation6], 0
    // Predicated region
    $region2: #{tpu_custom_call.1} parent=1 // pred_check
      _
    $region3: #{tpu_custom_call.1} parent=1 // pred_check_branch
      %11 = sbr.rel (0) target = $region5
    $region4: #{tpu_custom_call.1} parent=1 // pred_region
      %13 = vsyncadd [#allocation5], 0
      %s15 = sshll.u32 %s1, 4
      %s16 = int_to_ptr.hbm [resolvable:$true] %s15
      %s17 = sshll.u32 [#allocation4], 4
      %s18 = int_to_ptr.vmem [resolvable:$true] %s17
      %20 = dma.hbm_to_vmem [thread:$0]  %s16, 256, %s18, [#allocation5]
    $region5: #{tpu_custom_call.1} parent=1 // pred_fallthru
      _
    // Predicated region
    $region6: #{tpu_custom_call.1} parent=1 // pred_check
      _
    $region7: #{tpu_custom_call.1} parent=1 // pred_check_branch
      %22 = sbr.rel (0) target = $region9
    $region8: #{tpu_custom_call.1} parent=1 // pred_region
      %24 = dma.done [#allocation5], 256
    $region9: #{tpu_custom_call.1} parent=1 // pred_fallthru
      _
    %v25 = vld [vmem:[#allocation4] sm:$0xff]
    %v26 = vld [vmem:[#allocation4 + $0x8] sm:$0xff]
    %v27 = vtanh.pop %v25
    %v28 = vtanh.pop %v26
    %s29 = sld [smem:[#allocation3]]
    %v30 = vstv %s29
    %v31 = vmul.f32 %v27, %v30
    %v32 = vmul.f32 %v28, %v30
    %33 = vst [vmem:[#allocation7] sm:$0xff] %v31
    %34 = vst [vmem:[#allocation7 + $0x8] sm:$0xff] %v32
    // Predicated region
    $region10: #{tpu_custom_call.1} parent=1 // pred_check
      _
    $region11: #{tpu_custom_call.1} parent=1 // pred_check_branch
      %36 = sbr.rel (0) target = $region13
    $region12: #{tpu_custom_call.1} parent=1 // pred_region
      %38 = vsyncadd [#allocation6], 0
      %s40 = sshll.u32 [#allocation7], 4
      %s41 = int_to_ptr.vmem [resolvable:$true] %s40
      %s42 = sshll.u32 %s2, 4
      %s43 = int_to_ptr.hbm [resolvable:$true] %s42
      %45 = dma.vmem_to_hbm [thread:$0]  %s41, 256, %s43, [#allocation6]
    $region13: #{tpu_custom_call.1} parent=1 // pred_fallthru
      _
    // Predicated region
    $region14: #{tpu_custom_call.1} parent=1 // pred_check
      _
    $region15: #{tpu_custom_call.1} parent=1 // pred_check_branch
      %47 = sbr.rel (0) target = $region17
    $region16: #{tpu_custom_call.1} parent=1 // pred_region
      %49 = dma.done [#allocation6], 256
    $region17: #{tpu_custom_call.1} parent=1 // pred_fallthru
      _
    %50 = vsyncpa [#allocation5], 1
    %51 = vsyncpa [#allocation6], 1

</llo_original>
